<compile_context>
chip_gen: v6e
topology: v6e:2x2x1
jax: 0.10.0
libtpu: 0.0.40
codegen_flags: <defaults>
</compile_context>

<pallas_src>
import functools

import jax
import jax.numpy as jnp
from jax.experimental import pallas as pl
from jax.experimental.pallas import tpu as pltpu

_LANE = 128            # lane width / last-dim tiling unit
_SUB = 8               # sublane rows of the node slab (two 4-row node groups)
_MAX_TILE_LANES = 131072   # 4 MiB/tile cap -> VMEM budget stays < v7x's 64 MiB


def _round_up(a, b):
    return -(-a // b) * b


# --------------------------------------------------------------------------
# Kernel bodies
# --------------------------------------------------------------------------

def _accumulate_tile(xs, acc_ref, *, fx, num_b):
    """Accumulate one [8, nt] packed tile into acc_ref [B, 4].

    xs rows: 0..fx-1 = x^T (group A), fx = ones (A), fx+1 = graph ids (A),
             4..4+fx-1 = x^T (group B), 4+fx = ones (B), 4+fx+1 = ids (B).
    acc cols: 0..fx-1 = per-graph feature sums, fx = per-graph counts,
              fx+1.. = ignored (sum of ids; harmless).
    Padded columns carry ones=0 and id=B (matches no graph) -> contribute 0.
    """
    nt = xs.shape[1]
    graph_ids = jax.lax.broadcasted_iota(
        jnp.int32, (num_b, nt), 0).astype(jnp.float32)                 # [B, nt]
    # Float equality is exact: both sides are small non-negative integers.
    onehot_a = (graph_ids == xs[fx + 1:fx + 2, :]).astype(jnp.float32)  # [B, nt]
    onehot_b = (graph_ids == xs[4 + fx + 1:4 + fx + 2, :]).astype(jnp.float32)
    dn = (((1,), (1,)), ((), ()))   # contract the lane (node) axis on the MXU
    acc_ref[...] += (
        jax.lax.dot_general(onehot_a, xs[0:4, :], dimension_numbers=dn,
                            preferred_element_type=jnp.float32)
        + jax.lax.dot_general(onehot_b, xs[4:8, :], dimension_numbers=dn,
                              preferred_element_type=jnp.float32))      # [B, 4]


def _mlp_epilogue(seg, p, num_b, fu, fx):
    """mean -> cat([u, mean]) @ W1^T + b1 -> ReLU -> @ W2^T + b2, from the
    packed parameter slab p (layout in _pack_params; u folded at cols 8..)."""
    counts = seg[:, fx:fx + 1]                                  # [B, 1]
    seg_mean = seg[:, 0:fx] / jnp.maximum(counts, 1.0)          # exact divide
    w1u = p[0:fu, 0:4]                                          # [fu, 4]
    w1x = p[fu:fu + fx, 0:4]                                    # [fx, 4]
    b1 = p[4:5, 0:4]                                            # [1, 4]
    w2 = p[0:4, 4:8]                                            # [4, 4]
    b2 = p[4:5, 4:8]                                            # [1, 4]
    u = p[0:num_b, 8:8 + fu]                                    # [B, fu]
    # cat([u, mean], 1) @ W1.T folded into two partial matmuls (no concat).
    h = (jnp.dot(u, w1u, preferred_element_type=jnp.float32)
         + jnp.dot(seg_mean, w1x, preferred_element_type=jnp.float32)
         + b1)
    h = jnp.maximum(h, 0.0)                                     # ReLU
    return jnp.dot(h, w2, preferred_element_type=jnp.float32) + b2


def _fused_kernel(x_ref, p_ref, out_ref, acc_ref, *, fu, fx):
    """Single-core path: segment mean + MLP fully in one kernel."""
    k = pl.program_id(0)
    num_b = out_ref.shape[0]

    @pl.when(k == 0)
    def _init():
        acc_ref[...] = jnp.zeros_like(acc_ref)

    _accumulate_tile(x_ref[...], acc_ref, fx=fx, num_b=num_b)

    @pl.when(k == pl.num_programs(0) - 1)
    def _epilogue():
        y = _mlp_epilogue(acc_ref[...], p_ref[...], num_b, fu, fx)
        out_ref[...] = y.astype(out_ref.dtype)


def _segment_kernel(x_ref, part_ref, acc_ref, *, fx):
    """Multi-core path: each core accumulates its node range into its own
    partial [B, 4] output slot (leading grid axis is "parallel")."""
    k = pl.program_id(1)
    num_b = part_ref.shape[0]          # block (None, B, 4) -> kernel sees (B, 4)

    @pl.when(k == 0)
    def _init():
        acc_ref[...] = jnp.zeros_like(acc_ref)

    _accumulate_tile(x_ref[...], acc_ref, fx=fx, num_b=num_b)

    @pl.when(k == pl.num_programs(1) - 1)
    def _epilogue():
        part_ref[...] = acc_ref[...]


def _combine_kernel(part_ref, p_ref, out_ref, *, fu, fx):
    """Tiny follow-up kernel: sum per-core partials, then mean + MLP."""
    num_b = out_ref.shape[0]
    seg = jnp.sum(part_ref[...], axis=0)                        # [B, 4]
    y = _mlp_epilogue(seg, p_ref[...], num_b, fu, fx)
    out_ref[...] = y.astype(out_ref.dtype)


# --------------------------------------------------------------------------
# Host-side packing
# --------------------------------------------------------------------------

def _pack_params(params, u, fu, fx):
    """Pack W1, b1, W2, b2 and u into one (rows, 128) f32 slab.

    cols 0:4  rows 0:fu   = W1[:, :fu]^T   (u part of layer 1)
    cols 0:4  rows fu:4   = W1[:, fu:]^T   (mean part of layer 1)
    cols 0:4  row  4      = b1
    cols 4:8  rows 0:4    = W2^T
    cols 4:8  row  4      = b2
    cols 8:8+fu rows 0:B  = u               (operand folding)
    """
    num_b = u.shape[0]
    rows = max(_SUB, _round_up(num_b, _SUB))
    w1 = jnp.asarray(params["W1"], jnp.float32)   # [4, fu+fx]
    b1 = jnp.asarray(params["b1"], jnp.float32)   # [4]
    w2 = jnp.asarray(params["W2"], jnp.float32)   # [4, 4]
    b2 = jnp.asarray(params["b2"], jnp.float32)   # [4]
    p = jnp.zeros((rows, _LANE), jnp.float32)
    p = p.at[0:fu, 0:4].set(w1[:, :fu].T)
    p = p.at[fu:fu + fx, 0:4].set(w1[:, fu:].T)
    p = p.at[4, 0:4].set(b1)
    p = p.at[0:4, 4:8].set(w2.T)
    p = p.at[4, 4:8].set(b2)
    p = p.at[0:num_b, 8:8 + fu].set(jnp.asarray(u, jnp.float32))
    return p


def _pack_nodes(x, batch, num_b, half_lanes):
    """Lane-dense node slab [8, half_lanes] with TWO node groups packed into
    the 8 sublanes (halves HBM bytes/node vs. the previous 4-used/4-zero rows)."""
    n, fx = x.shape
    h = half_lanes
    n1 = min(n, h)          # nodes [0, n1) -> group A columns [0, n1)
    n2 = n - n1             # nodes [n1, n) -> group B columns [0, n2)
    x_t = jnp.asarray(x, jnp.float32).T                                  # [fx, N]
    bat = jnp.asarray(batch, jnp.int32).astype(jnp.float32)              # [N]
    slab = jnp.zeros((_SUB, h), jnp.float32)
    # group A
    slab = slab.at[0:fx, 0:n1].set(x_t[:, 0:n1])
    slab = slab.at[fx, 0:n1].set(1.0)
    ids_a = jnp.full((h,), float(num_b), jnp.float32).at[0:n1].set(bat[0:n1])
    slab = slab.at[fx + 1, :].set(ids_a)
    # group B
    ids_b = jnp.full((h,), float(num_b), jnp.float32)
    if n2 > 0:
        slab = slab.at[4:4 + fx, 0:n2].set(x_t[:, n1:n])
        slab = slab.at[4 + fx, 0:n2].set(1.0)
        ids_b = ids_b.at[0:n2].set(bat[n1:n])
    slab = slab.at[4 + fx + 1, :].set(ids_b)
    return slab


# --------------------------------------------------------------------------
# Public wrapper
# --------------------------------------------------------------------------

def global_model_forward(x, batch, u, params, *, max_node_tile=262144,
                         num_cores=1):
    """x: [N, Fx] f32, batch: [N] int32 in [0, B), u: [B, Fu] f32 -> [B, 4].

    max_node_tile: nodes per grid step (two nodes per lane); default 256K nodes
    = 128K lanes = 4 MiB per tile, amortizing per-step overhead on all gens.
    num_cores=2 enables the v7x megacore split (partial sums + tiny combine
    kernel); it also runs correctly (serially) on 1-TC chips.
    """
    B, Fu = u.shape
    N, Fx = x.shape
    assert Fu + Fx == 4, "GlobalModel MLP expects cat([u, mean(x)]) of width 4"
    assert 1 <= Fx <= 2 and Fu >= 1
    assert B < 2 ** 24, "f32 graph ids must stay exact"
    assert num_cores >= 1

    # ---- tile / pad the node (lane) axis; two nodes per lane ----
    half_needed = max(1, -(-N // 2))                       # ceil(N/2)
    half_lanes = _round_up(half_needed, _LANE)
    nt = _round_up(max(max_node_tile, 2 * _LANE), 2 * _LANE) // 2   # lanes/tile
    nt = min(nt, _MAX_TILE_LANES, half_lanes)
    H = _round_up(half_lanes, nt * num_cores)              # padded lanes
    tiles_total = H // nt
    tiles_per_core = tiles_total // num_cores

    x_slab = _pack_nodes(x, batch, B, H)                   # [8, H]
    p_slab = _pack_params(params, u, Fu, Fx)               # [>=8, 128]

    tile_bytes = _SUB * nt * 4
    # Tile + double buffer + iota/one-hot intermediates; capped tile keeps this
    # <= 48 MiB, inside v7x's 64 MiB physical VMEM with headroom.
    vmem_limit = int(max(32 * 1024 * 1024, 12 * tile_bytes))
    cost = pl.CostEstimate(
        flops=16 * B * H,                    # two [B,nt]x[4,nt] matmuls per tile
        transcendentals=0,
        bytes_accessed=int(_SUB * H * 4 + p_slab.size * 4 + B * 4 * 4))

    if num_cores == 1:
        kernel = functools.partial(_fused_kernel, fu=Fu, fx=Fx)
        return pl.pallas_call(
            kernel,
            out_shape=jax.ShapeDtypeStruct((B, 4), jnp.float32),
            grid_spec=pltpu.PrefetchScalarGridSpec(
                num_scalar_prefetch=0,
                grid=(tiles_total,),
                in_specs=[
                    pl.BlockSpec((_SUB, nt), lambda k: (0, k)),       # node slab
                    pl.BlockSpec(p_slab.shape, lambda k: (0, 0)),     # params+u
                ],
                out_specs=pl.BlockSpec((B, 4), lambda k: (0, 0)),
                scratch_shapes=[pltpu.VMEM((B, 4), jnp.float32)],
            ),
            compiler_params=pltpu.CompilerParams(
                dimension_semantics=("arbitrary",),
                vmem_limit_bytes=vmem_limit),
            cost_estimate=cost,
        )(x_slab, p_slab)

    # ---- v7x megacore path: per-core partial sums, then tiny combine kernel ----
    tpc = tiles_per_core
    seg_kernel = functools.partial(_segment_kernel, fx=Fx)
    partial = pl.pallas_call(
        seg_kernel,
        out_shape=jax.ShapeDtypeStruct((num_cores, B, 4), jnp.float32),
        grid_spec=pltpu.PrefetchScalarGridSpec(
            num_scalar_prefetch=0,
            grid=(num_cores, tpc),
            in_specs=[
                pl.BlockSpec((_SUB, nt), lambda c, k: (0, c * tpc + k)),
            ],
            out_specs=pl.BlockSpec((None, B, 4), lambda c, k: (c, 0, 0)),
            scratch_shapes=[pltpu.VMEM((B, 4), jnp.float32)],
        ),
        compiler_params=pltpu.CompilerParams(
            dimension_semantics=("parallel", "arbitrary"),
            vmem_limit_bytes=vmem_limit),
        cost_estimate=cost,
    )(x_slab)

    comb_kernel = functools.partial(_combine_kernel, fu=Fu, fx=Fx)
    return pl.pallas_call(
        comb_kernel,
        out_shape=jax.ShapeDtypeStruct((B, 4), jnp.float32),
        grid_spec=pltpu.PrefetchScalarGridSpec(
            num_scalar_prefetch=0,
            grid=(1,),
            in_specs=[
                pl.BlockSpec((num_cores, B, 4), lambda i: (0, 0, 0)),
                pl.BlockSpec(p_slab.shape, lambda i: (0, 0)),
            ],
            out_specs=pl.BlockSpec((B, 4), lambda i: (0, 0)),
        ),
        compiler_params=pltpu.CompilerParams(
            dimension_semantics=("arbitrary",)),
    )(partial, p_slab)


# --------------------------------------------------------------------------
# Reference + self-test
# --------------------------------------------------------------------------

def _reference(x, batch, u, params):
    """Pure-JAX reference mirroring the PyTorch forward."""
    B = u.shape[0]
    seg_sum = jax.ops.segment_sum(x, batch, num_segments=B)
    counts = jax.ops.segment_sum(jnp.ones((x.shape[0],), jnp.float32), batch,
                                 num_segments=B)[:, None]
    seg_mean = seg_sum / jnp.maximum(counts, 1.0)
    out = jnp.concatenate([u, seg_mean], axis=1)
    h = jnp.maximum(out @ params["W1"].T + params["b1"], 0.0)
    return h @ params["W2"].T + params["b2"]


if __name__ == "__main__":
    key = jax.random.PRNGKey(0)
    (k_x, k_u, k_b, k_w1, k_b1, k_w2, k_b2, k_x2, k_b2i) = jax.random.split(key, 9)

    # Shapes implied by the module: Lin(4,4) input => Fu + Fx = 4.
    B, Fx, Fu = 4, 2, 2
    params = {
        "W1": jax.random.normal(k_w1, (4, 4), jnp.float32) * 0.5,
        "b1": jax.random.normal(k_b1, (4,), jnp.float32) * 0.1,
        "W2": jax.random.normal(k_w2, (4, 4), jnp.float32) * 0.5,
        "b2": jax.random.normal(k_b2, (4,), jnp.float32) * 0.1,
    }

    # Small case: single grid step, fused kernel.
    N = 16
    x = jax.random.normal(k_x, (N, Fx), jnp.float32)
    u = jax.random.normal(k_u, (B, Fu), jnp.float32)
    batch = jax.random.randint(k_b, (N,), 0, B, jnp.int32)
    out = jax.block_until_ready(global_model_forward(x, batch, u, params))
    ref = _reference(x, batch, u, params)
    assert out.shape == (B, 4)
    assert jnp.allclose(out, ref, atol=1e-5, rtol=1e-5), "mismatch (N=16)"

    # Multi-tile case: exercises the N-grid, 2x-packed halves, accumulator
    # scratch and tail masking (small tile forces several grid steps).
    N2 = 300
    x2 = jax.random.normal(k_x2, (N2, Fx), jnp.float32)
    batch2 = jax.random.randint(k_b2i, (N2,), 0, B, jnp.int32)
    out2 = jax.block_until_ready(
        global_model_forward(x2, batch2, u, params, max_node_tile=256))
    ref2 = _reference(x2, batch2, u, params)
    assert jnp.allclose(out2, ref2, atol=1e-5, rtol=1e-5), "mismatch (N=300)"

    # Two-core split (v7x megacore path); runs serially-but-correctly on
    # single-TensorCore chips, so it is exercised here as well.
    out3 = jax.block_until_ready(
        global_model_forward(x2, batch2, u, params, max_node_tile=256,
                             num_cores=2))
    assert jnp.allclose(out3, ref2, atol=1e-5, rtol=1e-5), "mismatch (2-core)"

    print("KERNEL_OK")
</pallas_src>

<mosaic_0001>
module attributes {stable_mosaic.version = 11 : i64} {
  func.func @_fused_kernel(%arg0: i32, %arg1: memref<8x128xf32, #tpu.memory_space<vmem>>, %arg2: memref<8x128xf32, #tpu.memory_space<vmem>>, %arg3: memref<4x4xf32, #tpu.memory_space<vmem>>, %arg4: memref<4x4xf32, #tpu.memory_space<vmem>>) attributes {dimension_semantics = [#tpu.dimension_semantics<arbitrary>], iteration_bounds = array<i64: 1>, scalar_prefetch = 0 : i64, scratch_operands = 1 : i64, tpu.core_type = #tpu.core_type<tc>, window_params = [{transform_indices = @transform_0, window_bounds = array<i64: 8, 128>}, {pipeline_mode = #tpu.pipeline_mode<synchronous>, transform_indices = @transform_1, window_bounds = array<i64: 8, 128>}, {pipeline_mode = #tpu.pipeline_mode<synchronous>, transform_indices = @transform_2, window_bounds = array<i64: 4, 4>}]} {
    %c0_i32 = arith.constant 0 : i32
    %0 = arith.cmpi eq, %arg0, %c0_i32 : i32
    %1 = arith.extui %0 : i1 to i32
    %c0_i32_0 = arith.constant 0 : i32
    %2 = arith.cmpi ne, %1, %c0_i32_0 : i32
    scf.if %2 {
      %cst_9 = arith.constant 0.000000e+00 : f32
      %27 = vector.broadcast %cst_9 : f32 to vector<4x4xf32>
      %c0_10 = arith.constant 0 : index
      %c0_11 = arith.constant 0 : index
      %28 = vector.load %arg4[%c0_10, %c0_11] : memref<4x4xf32, #tpu.memory_space<vmem>>, vector<4x4xf32>
      tpu.vector_store %arg4[%c0_10, %c0_11], %27 {strides = array<i32>} : memref<4x4xf32, #tpu.memory_space<vmem>>, vector<4x4xf32>,
    } else {
    }
    %c0 = arith.constant 0 : index
    %c0_1 = arith.constant 0 : index
    %3 = vector.load %arg1[%c0, %c0_1] : memref<8x128xf32, #tpu.memory_space<vmem>>, vector<8x128xf32>
    %4 = tpu.iota {dimensions = array<i32: 0>} : vector<4x128xi32>
    %5 = arith.sitofp %4 : vector<4x128xi32> to vector<4x128xf32>
    %6 = vector.extract_strided_slice %3 {offsets = [3, 0], sizes = [1, 128], strides = [1, 1]} : vector<8x128xf32> to vector<1x128xf32>
    %7 = vector.broadcast %6 : vector<1x128xf32> to vector<4x128xf32>
    %8 = arith.cmpf oeq, %5, %7 : vector<4x128xf32>
    %9 = arith.extui %8 : vector<4x128xi1> to vector<4x128xi32>
    %10 = arith.sitofp %9 : vector<4x128xi32> to vector<4x128xf32>
    %11 = vector.extract_strided_slice %3 {offsets = [7, 0], sizes = [1, 128], strides = [1, 1]} : vector<8x128xf32> to vector<1x128xf32>
    %12 = vector.broadcast %11 : vector<1x128xf32> to vector<4x128xf32>
    %13 = arith.cmpf oeq, %5, %12 : vector<4x128xf32>
    %14 = arith.extui %13 : vector<4x128xi1> to vector<4x128xi32>
    %15 = arith.sitofp %14 : vector<4x128xi32> to vector<4x128xf32>
    %c0_2 = arith.constant 0 : index
    %c0_3 = arith.constant 0 : index
    %16 = vector.load %arg4[%c0_2, %c0_3] : memref<4x4xf32, #tpu.memory_space<vmem>>, vector<4x4xf32>
    %17 = vector.extract_strided_slice %3 {offsets = [0, 0], sizes = [4, 128], strides = [1, 1]} : vector<8x128xf32> to vector<4x128xf32>
    %cst = arith.constant dense<0.000000e+00> : vector<4x4xf32>
    %18 = tpu.matmul %10, %17, %cst {dimension_numbers = #tpu.dot_dimension_numbers<[1], [1], [0], [0], [0, 0, 1, 0], [], []>} : vector<4x128xf32>, vector<4x128xf32>, vector<4x4xf32> -> vector<4x4xf32>
    %19 = vector.extract_strided_slice %3 {offsets = [4, 0], sizes = [4, 128], strides = [1, 1]} : vector<8x128xf32> to vector<4x128xf32>
    %cst_4 = arith.constant dense<0.000000e+00> : vector<4x4xf32>
    %20 = tpu.matmul %15, %19, %cst_4 {dimension_numbers = #tpu.dot_dimension_numbers<[1], [1], [0], [0], [0, 0, 1, 0], [], []>} : vector<4x128xf32>, vector<4x128xf32>, vector<4x4xf32> -> vector<4x4xf32>
    %21 = arith.addf %18, %20 : vector<4x4xf32>
    %22 = arith.addf %16, %21 : vector<4x4xf32>
    %c0_5 = arith.constant 0 : index
    %c0_6 = arith.constant 0 : index
    %23 = vector.load %arg4[%c0_5, %c0_6] : memref<4x4xf32, #tpu.memory_space<vmem>>, vector<4x4xf32>
    tpu.vector_store %arg4[%c0_5, %c0_6], %22 {strides = array<i32>} : memref<4x4xf32, #tpu.memory_space<vmem>>, vector<4x4xf32>,
    %c0_i32_7 = arith.constant 0 : i32
    %24 = arith.cmpi eq, %arg0, %c0_i32_7 : i32
    %25 = arith.extui %24 : i1 to i32
    %c0_i32_8 = arith.constant 0 : i32
    %26 = arith.cmpi ne, %25, %c0_i32_8 : i32
    scf.if %26 {
      %c0_9 = arith.constant 0 : index
      %c0_10 = arith.constant 0 : index
      %27 = vector.load %arg4[%c0_9, %c0_10] : memref<4x4xf32, #tpu.memory_space<vmem>>, vector<4x4xf32>
      %c0_11 = arith.constant 0 : index
      %c0_12 = arith.constant 0 : index
      %28 = vector.load %arg2[%c0_11, %c0_12] : memref<8x128xf32, #tpu.memory_space<vmem>>, vector<8x128xf32>
      %29 = vector.extract_strided_slice %27 {offsets = [0, 2], sizes = [4, 1], strides = [1, 1]} : vector<4x4xf32> to vector<4x1xf32>
      %30 = vector.extract_strided_slice %27 {offsets = [0, 0], sizes = [4, 2], strides = [1, 1]} : vector<4x4xf32> to vector<4x2xf32>
      %cst_13 = arith.constant 1.000000e+00 : f32
      %31 = vector.broadcast %cst_13 : f32 to vector<4x1xf32>
      %32 = arith.maximumf %29, %31 : vector<4x1xf32>
      %33 = vector.broadcast %32 : vector<4x1xf32> to vector<4x2xf32>
      %34 = arith.divf %30, %33 : vector<4x2xf32>
      %35 = vector.extract_strided_slice %28 {offsets = [0, 0], sizes = [2, 4], strides = [1, 1]} : vector<8x128xf32> to vector<2x4xf32>
      %36 = vector.extract_strided_slice %28 {offsets = [2, 0], sizes = [2, 4], strides = [1, 1]} : vector<8x128xf32> to vector<2x4xf32>
      %37 = vector.extract_strided_slice %28 {offsets = [4, 0], sizes = [1, 4], strides = [1, 1]} : vector<8x128xf32> to vector<1x4xf32>
      %38 = vector.extract_strided_slice %28 {offsets = [0, 4], sizes = [4, 4], strides = [1, 1]} : vector<8x128xf32> to vector<4x4xf32>
      %39 = vector.extract_strided_slice %28 {offsets = [4, 4], sizes = [1, 4], strides = [1, 1]} : vector<8x128xf32> to vector<1x4xf32>
      %40 = vector.extract_strided_slice %28 {offsets = [0, 8], sizes = [4, 2], strides = [1, 1]} : vector<8x128xf32> to vector<4x2xf32>
      %cst_14 = arith.constant dense<0.000000e+00> : vector<4x4xf32>
      %41 = tpu.matmul %40, %35, %cst_14 {dimension_numbers = #tpu.dot_dimension_numbers<[1], [0], [0], [1], [0, 0, 1, 1], [], []>} : vector<4x2xf32>, vector<2x4xf32>, vector<4x4xf32> -> vector<4x4xf32>
      %cst_15 = arith.constant dense<0.000000e+00> : vector<4x4xf32>
      %42 = tpu.matmul %34, %36, %cst_15 {dimension_numbers = #tpu.dot_dimension_numbers<[1], [0], [0], [1], [0, 0, 1, 1], [], []>} : vector<4x2xf32>, vector<2x4xf32>, vector<4x4xf32> -> vector<4x4xf32>
      %43 = arith.addf %41, %42 : vector<4x4xf32>
      %44 = vector.broadcast %37 : vector<1x4xf32> to vector<4x4xf32>
      %45 = arith.addf %43, %44 : vector<4x4xf32>
      %cst_16 = arith.constant 0.000000e+00 : f32
      %46 = vector.broadcast %cst_16 : f32 to vector<4x4xf32>
      %47 = arith.maximumf %45, %46 : vector<4x4xf32>
      %cst_17 = arith.constant dense<0.000000e+00> : vector<4x4xf32>
      %48 = tpu.matmul %47, %38, %cst_17 {dimension_numbers = #tpu.dot_dimension_numbers<[1], [0], [0], [1], [0, 0, 1, 1], [], []>} : vector<4x4xf32>, vector<4x4xf32>, vector<4x4xf32> -> vector<4x4xf32>
      %49 = vector.broadcast %39 : vector<1x4xf32> to vector<4x4xf32>
      %50 = arith.addf %48, %49 : vector<4x4xf32>
      %c0_18 = arith.constant 0 : index
      %c0_19 = arith.constant 0 : index
      %51 = vector.load %arg3[%c0_18, %c0_19] : memref<4x4xf32, #tpu.memory_space<vmem>>, vector<4x4xf32>
      tpu.vector_store %arg3[%c0_18, %c0_19], %50 {strides = array<i32>} : memref<4x4xf32, #tpu.memory_space<vmem>>, vector<4x4xf32>,
    } else {
    }
    return
  }
  func.func @transform_0(%arg0: i32) -> (i32, i32) {
    %c0_i32 = arith.constant 0 : i32
    %c0_i32_0 = arith.constant 0 : i32
    return %c0_i32, %arg0 : i32, i32
  }
  func.func @transform_1(%arg0: i32) -> (i32, i32) {
    %c0_i32 = arith.constant 0 : i32
    %c0_i32_0 = arith.constant 0 : i32
    %c0_i32_1 = arith.constant 0 : i32
    return %c0_i32, %c0_i32_0 : i32, i32
  }
  func.func @transform_2(%arg0: i32) -> (i32, i32) {
    %c0_i32 = arith.constant 0 : i32
    %c0_i32_0 = arith.constant 0 : i32
    %c0_i32_1 = arith.constant 0 : i32
    return %c0_i32, %c0_i32_0 : i32, i32
  }
}

</mosaic_0001>

<llo_original>
// kernel: tpu_custom_call.1
$region0: #{tpu_custom_call.1}
  #allocation0 [shape = 'u32[]', space=smem, size = 0x4, offset = 0x4, fixed_abs, tag = 'smem constant byte address 0x4 - core index']
  #allocation1 [shape = 'u32[144,128]{1,0:T(1,128)}', space=vmem, size = 0x12000, scoped, tag = 'internal scratch']
  #allocation2 [shape = 'f32[4,4]{1,0:T(4,128)}', space=vmem, size = 0x800, scoped, tag = 'scratch operand']
  %s0 = inlined_call_operand.hbm [shape: f32[8,128], index: 0, kind: input, shape index: {}]
  %s1 = inlined_call_operand.hbm [shape: f32[8,128], index: 1, kind: input, shape index: {}]
  %s2 = inlined_call_operand.hbm [shape: f32[4,4], index: 2, kind: output, shape index: {}]
  %s3 = sld [smem:[#allocation0]]
  $region34: #{tpu_custom_call.1} parent=0
    _
  %s5 = ssub.s32 1, %s3
  %s6 = scalar_select 0, %s5, %s3
  $region1: #{tpu_custom_call.1} parent=0
    #allocation3 [shape = 'u8[4096]{0}', space=vmem, size = 0x1000, scoped, tag = 'input window, operand 0, single buffered']
    #allocation4 [shape = 's32[1]{0}', space=sflag, size = 0x4, scoped, tag = 'scoped memory for tpu_custom_call.1']
    #allocation5 [shape = 's32[1]{0}', space=sflag, size = 0x4, scoped, tag = 'scoped memory for tpu_custom_call.1']
    #allocation6 [shape = 'u8[4096]{0}', space=vmem, size = 0x1000, scoped, tag = 'input window, operand 1, single buffered']
    #allocation7 [shape = 's32[1]{0}', space=sflag, size = 0x4, scoped, tag = 'scoped memory for tpu_custom_call.1']
    #allocation8 [shape = 'u8[2048]{0}', space=vmem, size = 0x800, scoped, tag = 'output window, operand 0, single buffered']
    %7 = vsyncpa [#allocation4], 0
    %8 = vsyncpa [#allocation7], 0
    %9 = vsyncpa [#allocation5], 0
    // Predicated region
    $region2: #{tpu_custom_call.1} parent=1 // pred_check
      _
    $region3: #{tpu_custom_call.1} parent=1 // pred_check_branch
      %11 = sbr.rel (0) target = $region5
    $region4: #{tpu_custom_call.1} parent=1 // pred_region
      %s13 = ssub.s32 128, 128
      %14 = vsyncadd [#allocation4], %s13
      %s16 = sshll.u32 [#allocation3], 4
      %s17 = int_to_ptr.vmem [resolvable:$true] %s16
      %19 = dma.hbm_to_vmem [thread:$0]  %s0, 128, %s17, [#allocation4]
    $region5: #{tpu_custom_call.1} parent=1 // pred_fallthru
      _
    // Predicated region
    $region6: #{tpu_custom_call.1} parent=1 // pred_check
      _
    $region7: #{tpu_custom_call.1} parent=1 // pred_check_branch
      %21 = sbr.rel (0) target = $region9
    $region8: #{tpu_custom_call.1} parent=1 // pred_region
      %s23 = ssub.s32 128, 128
      %24 = vsyncadd [#allocation7], %s23
      %s26 = sshll.u32 [#allocation6], 4
      %s27 = int_to_ptr.vmem [resolvable:$true] %s26
      %29 = dma.hbm_to_vmem [thread:$0]  %s1, 128, %s27, [#allocation7]
    $region9: #{tpu_custom_call.1} parent=1 // pred_fallthru
      _
    // Predicated region
    $region10: #{tpu_custom_call.1} parent=1 // pred_check
      _
    $region11: #{tpu_custom_call.1} parent=1 // pred_check_branch
      %31 = sbr.rel (0) target = $region13
    $region12: #{tpu_custom_call.1} parent=1 // pred_region
      %32 = dma.done [#allocation4], 128
    $region13: #{tpu_custom_call.1} parent=1 // pred_fallthru
      _
    // Predicated region
    $region14: #{tpu_custom_call.1} parent=1 // pred_check
      _
    $region15: #{tpu_custom_call.1} parent=1 // pred_check_branch
      %34 = sbr.rel (0) target = $region17
    $region16: #{tpu_custom_call.1} parent=1 // pred_region
      %35 = dma.done [#allocation7], 128
    $region17: #{tpu_custom_call.1} parent=1 // pred_fallthru
      _
    %p36 = scmp.eq.s32.totalorder 0, 0
    // Predicated region
    $region18: #{tpu_custom_call.1} parent=1 // pred_check
      %p37 = pneg %p36
    $region19: #{tpu_custom_call.1} parent=1 // pred_check_branch
      %39 = sbr.rel (%p37) target = $region21
    $region20: #{tpu_custom_call.1} parent=1 // pred_region
      %vm40 = vcmask 27648
      %41 = vst.msk [vmem:[#allocation2] sm:$0xf] %vm40, 0.0
    $region21: #{tpu_custom_call.1} parent=1 // pred_fallthru
      _
    %v42 = vld [vmem:[#allocation3] sm:$0xff]
    %v43 = vlaneseq
    %v44 = vshrl.u32 %v43, 7
    %v45 = vcvt.s32.f32 %v44
    %v46 = vlaneseq
    %v47 = vshrl.u32 %v46, 7
    %v48 = vsub.s32 3, %v47
    %v49 = vrot.slane %v42, %v48
    %vm50 = vcmp.eq.f32.partialorder %v45, %v49
    %v51 = vsel %vm50, 1, 0
    %v52 = vcvt.s32.f32 %v51
    %v53 = vlaneseq
    %v54 = vshrl.u32 %v53, 7
    %v55 = vsub.s32 7, %v54
    %v56 = vrot.slane %v42, %v55
    %vm57 = vcmp.eq.f32.partialorder %v45, %v56
    %v58 = vsel %vm57, 1, 0
    %v59 = vcvt.s32.f32 %v58
    %v60 = vld [vmem:[#allocation2] sm:$0xf]
    %v62 = vrot.slane %v42, 4
    %64 = vmatprep.subr.mxu0 0.0
    %65 = vmatpush1.xpose.msra.mxu0 0.0
    %66 = vmatprep.subr.mxu0 0.0
    %67 = vmatpush1.xpose.msra.mxu0 0.0
    %68 = vmatprep.subr.mxu0 0.0
    %69 = vmatpush1.xpose.msra.mxu0 0.0
    %70 = vmatprep.subr.mxu0 0.0
    %71 = vmatpush1.xpose.msra.mxu0 0.0
    %72 = vmatprep.subr.mxu0 0.0
    %73 = vmatpush1.xpose.msra.mxu0 0.0
    %74 = vmatprep.subr.mxu0 0.0
    %75 = vmatpush1.xpose.msra.mxu0 0.0
    %76 = vmatprep.subr.mxu0 0.0
    %77 = vmatpush1.xpose.msra.mxu0 0.0
    %78 = vmatprep.subr.mxu0 0.0
    %79 = vmatpush1.xpose.msra.mxu0 0.0
    %80 = vmatprep.subr.mxu0 0.0
    %81 = vmatpush1.xpose.msra.mxu0 0.0
    %82 = vmatprep.subr.mxu0 0.0
    %83 = vmatpush1.xpose.msra.mxu0 0.0
    %84 = vmatprep.subr.mxu0 0.0
    %85 = vmatpush1.xpose.msra.mxu0 0.0
    %86 = vmatprep.subr.mxu0 0.0
    %87 = vmatpush1.xpose.msra.mxu0 0.0
    %88 = vmatprep.subr.mxu0 0.0
    %89 = vmatpush1.xpose.msra.mxu0 0.0
    %90 = vmatprep.subr.mxu0 0.0
    %91 = vmatpush1.xpose.msra.mxu0 0.0
    %92 = vmatprep.subr.mxu0 0.0
    %93 = vmatpush1.xpose.msra.mxu0 0.0
    %94 = vmatprep.subr.mxu0 0.0
    %95 = vmatpush1.xpose.msra.mxu0 %v62
    %96 = vmatprep.subr.mxu0 0.0
    %97 = vmatpush2.xpose.msra.mxu0 0.0
    %98 = vmatprep.subr.mxu0 0.0
    %99 = vmatpush2.xpose.msra.mxu0 0.0
    %100 = vmatprep.subr.mxu0 0.0
    %101 = vmatpush2.xpose.msra.mxu0 0.0
    %102 = vmatprep.subr.mxu0 0.0
    %103 = vmatpush2.xpose.msra.mxu0 0.0
    %104 = vmatprep.subr.mxu0 0.0
    %105 = vmatpush2.xpose.msra.mxu0 0.0
    %106 = vmatprep.subr.mxu0 0.0
    %107 = vmatpush2.xpose.msra.mxu0 0.0
    %108 = vmatprep.subr.mxu0 0.0
    %109 = vmatpush2.xpose.msra.mxu0 0.0
    %110 = vmatprep.subr.mxu0 0.0
    %111 = vmatpush2.xpose.msra.mxu0 0.0
    %112 = vmatprep.subr.mxu0 0.0
    %113 = vmatpush2.xpose.msra.mxu0 0.0
    %114 = vmatprep.subr.mxu0 0.0
    %115 = vmatpush2.xpose.msra.mxu0 0.0
    %116 = vmatprep.subr.mxu0 0.0
    %117 = vmatpush2.xpose.msra.mxu0 0.0
    %118 = vmatprep.subr.mxu0 0.0
    %119 = vmatpush2.xpose.msra.mxu0 0.0
    %120 = vmatprep.subr.mxu0 0.0
    %121 = vmatpush2.xpose.msra.mxu0 0.0
    %122 = vmatprep.subr.mxu0 0.0
    %123 = vmatpush2.xpose.msra.mxu0 0.0
    %124 = vmatprep.subr.mxu0 0.0
    %125 = vmatpush2.xpose.msra.mxu0 0.0
    %126 = vmatprep.subr.mxu0 0.0
    %127 = vmatpush2.xpose.msra.mxu0 0.0
    %128 = vmatprep.mubr.f32.mxu0 0.0
    %129 = vmatmul.mubr.f32.gmra.mxu0 %v59
    %v130 = vpop.f32.mrf.mxu0
    %v131 = vadd.f32 0.0, %v130
    %v132 = vpop.f32.mrf.mxu0
    %133 = vdwg.mxu0
    %134 = vmatprep.subr.mxu0 0.0
    %135 = vmatpush1.xpose.msra.mxu0 0.0
    %136 = vmatprep.subr.mxu0 0.0
    %137 = vmatpush1.xpose.msra.mxu0 0.0
    %138 = vmatprep.subr.mxu0 0.0
    %139 = vmatpush1.xpose.msra.mxu0 0.0
    %140 = vmatprep.subr.mxu0 0.0
    %141 = vmatpush1.xpose.msra.mxu0 0.0
    %142 = vmatprep.subr.mxu0 0.0
    %143 = vmatpush1.xpose.msra.mxu0 0.0
    %144 = vmatprep.subr.mxu0 0.0
    %145 = vmatpush1.xpose.msra.mxu0 0.0
    %146 = vmatprep.subr.mxu0 0.0
    %147 = vmatpush1.xpose.msra.mxu0 0.0
    %148 = vmatprep.subr.mxu0 0.0
    %149 = vmatpush1.xpose.msra.mxu0 0.0
    %150 = vmatprep.subr.mxu0 0.0
    %151 = vmatpush1.xpose.msra.mxu0 0.0
    %152 = vmatprep.subr.mxu0 0.0
    %153 = vmatpush1.xpose.msra.mxu0 0.0
    %154 = vmatprep.subr.mxu0 0.0
    %155 = vmatpush1.xpose.msra.mxu0 0.0
    %156 = vmatprep.subr.mxu0 0.0
    %157 = vmatpush1.xpose.msra.mxu0 0.0
    %158 = vmatprep.subr.mxu0 0.0
    %159 = vmatpush1.xpose.msra.mxu0 0.0
    %160 = vmatprep.subr.mxu0 0.0
    %161 = vmatpush1.xpose.msra.mxu0 0.0
    %162 = vmatprep.subr.mxu0 0.0
    %163 = vmatpush1.xpose.msra.mxu0 0.0
    %164 = vmatprep.subr.mxu0 0.0
    %165 = vmatpush1.xpose.msra.mxu0 %v42
    %166 = vmatprep.subr.mxu0 0.0
    %167 = vmatpush2.xpose.msra.mxu0 0.0
    %168 = vmatprep.subr.mxu0 0.0
    %169 = vmatpush2.xpose.msra.mxu0 0.0
    %170 = vmatprep.subr.mxu0 0.0
    %171 = vmatpush2.xpose.msra.mxu0 0.0
    %172 = vmatprep.subr.mxu0 0.0
    %173 = vmatpush2.xpose.msra.mxu0 0.0
    %174 = vmatprep.subr.mxu0 0.0
    %175 = vmatpush2.xpose.msra.mxu0 0.0
    %176 = vmatprep.subr.mxu0 0.0
    %177 = vmatpush2.xpose.msra.mxu0 0.0
    %178 = vmatprep.subr.mxu0 0.0
    %179 = vmatpush2.xpose.msra.mxu0 0.0
    %180 = vmatprep.subr.mxu0 0.0
    %181 = vmatpush2.xpose.msra.mxu0 0.0
    %182 = vmatprep.subr.mxu0 0.0
    %183 = vmatpush2.xpose.msra.mxu0 0.0
    %184 = vmatprep.subr.mxu0 0.0
    %185 = vmatpush2.xpose.msra.mxu0 0.0
    %186 = vmatprep.subr.mxu0 0.0
    %187 = vmatpush2.xpose.msra.mxu0 0.0
    %188 = vmatprep.subr.mxu0 0.0
    %189 = vmatpush2.xpose.msra.mxu0 0.0
    %190 = vmatprep.subr.mxu0 0.0
    %191 = vmatpush2.xpose.msra.mxu0 0.0
    %192 = vmatprep.subr.mxu0 0.0
    %193 = vmatpush2.xpose.msra.mxu0 0.0
    %194 = vmatprep.subr.mxu0 0.0
    %195 = vmatpush2.xpose.msra.mxu0 0.0
    %196 = vmatprep.subr.mxu0 0.0
    %197 = vmatpush2.xpose.msra.mxu0 0.0
    %198 = vmatprep.mubr.f32.mxu0 0.0
    %199 = vmatmul.mubr.f32.gmra.mxu0 %v52
    %v200 = vpop.f32.mrf.mxu0
    %v201 = vadd.f32 %v131, %v200
    %v202 = vpop.f32.mrf.mxu0
    %203 = vdwg.mxu0
    %v204 = vadd.f32 %v60, %v201
    %vm205 = vcmask 27648
    %206 = vst.msk [vmem:[#allocation2] sm:$0xf] %vm205, %v204
    // Predicated region
    $region22: #{tpu_custom_call.1} parent=1 // pred_check
      %p207 = pneg %p36
    $region23: #{tpu_custom_call.1} parent=1 // pred_check_branch
      %209 = sbr.rel (%p207) target = $region25
    $region24: #{tpu_custom_call.1} parent=1 // pred_region
      %v210 = vld [vmem:[#allocation2] sm:$0xf]
      %v211 = vld [vmem:[#allocation6] sm:$0xff]
      %v212 = vmax.f32 %v210, 1.0
      %214 = vset.pattern.permute.xlu0 2
      %215 = vperm.xlu0 %214, %v212
      %v216 = vpop.permute.xlu0 %215
      %v218 = vrcp.pop %v216
      %v219 = vmul.f32 %v210, %v218
      %v221 = vrot.slane %v211, 2
      %vm222 = vcmask 15360
      %v224 = vsel %vm222, %v219, 0
      %vm226 = vcmask 1041408
      %v227 = vsel %vm226, %v221, 0
      %229 = vmatprep.subr.mxu0 0.0
      %230 = vmatpush1.msra.mxu0 0.0
      %231 = vmatprep.subr.mxu0 0.0
      %232 = vmatpush1.msra.mxu0 0.0
      %233 = vmatprep.subr.mxu0 0.0
      %234 = vmatpush1.msra.mxu0 0.0
      %235 = vmatprep.subr.mxu0 0.0
      %236 = vmatpush1.msra.mxu0 0.0
      %237 = vmatprep.subr.mxu0 0.0
      %238 = vmatpush1.msra.mxu0 0.0
      %239 = vmatprep.subr.mxu0 0.0
      %240 = vmatpush1.msra.mxu0 0.0
      %241 = vmatprep.subr.mxu0 0.0
      %242 = vmatpush1.msra.mxu0 0.0
      %243 = vmatprep.subr.mxu0 0.0
      %244 = vmatpush1.msra.mxu0 0.0
      %245 = vmatprep.subr.mxu0 0.0
      %246 = vmatpush1.msra.mxu0 0.0
      %247 = vmatprep.subr.mxu0 0.0
      %248 = vmatpush1.msra.mxu0 0.0
      %249 = vmatprep.subr.mxu0 0.0
      %250 = vmatpush1.msra.mxu0 0.0
      %251 = vmatprep.subr.mxu0 0.0
      %252 = vmatpush1.msra.mxu0 0.0
      %253 = vmatprep.subr.mxu0 0.0
      %254 = vmatpush1.msra.mxu0 0.0
      %255 = vmatprep.subr.mxu0 0.0
      %256 = vmatpush1.msra.mxu0 0.0
      %257 = vmatprep.subr.mxu0 0.0
      %258 = vmatpush1.msra.mxu0 0.0
      %259 = vmatprep.subr.mxu0 0.0
      %260 = vmatpush1.msra.mxu0 %v227
      %261 = vmatprep.subr.mxu0 0.0
      %262 = vmatpush2.msra.mxu0 0.0
      %263 = vmatprep.subr.mxu0 0.0
      %264 = vmatpush2.msra.mxu0 0.0
      %265 = vmatprep.subr.mxu0 0.0
      %266 = vmatpush2.msra.mxu0 0.0
      %267 = vmatprep.subr.mxu0 0.0
      %268 = vmatpush2.msra.mxu0 0.0
      %269 = vmatprep.subr.mxu0 0.0
      %270 = vmatpush2.msra.mxu0 0.0
      %271 = vmatprep.subr.mxu0 0.0
      %272 = vmatpush2.msra.mxu0 0.0
      %273 = vmatprep.subr.mxu0 0.0
      %274 = vmatpush2.msra.mxu0 0.0
      %275 = vmatprep.subr.mxu0 0.0
      %276 = vmatpush2.msra.mxu0 0.0
      %277 = vmatprep.subr.mxu0 0.0
      %278 = vmatpush2.msra.mxu0 0.0
      %279 = vmatprep.subr.mxu0 0.0
      %280 = vmatpush2.msra.mxu0 0.0
      %281 = vmatprep.subr.mxu0 0.0
      %282 = vmatpush2.msra.mxu0 0.0
      %283 = vmatprep.subr.mxu0 0.0
      %284 = vmatpush2.msra.mxu0 0.0
      %285 = vmatprep.subr.mxu0 0.0
      %286 = vmatpush2.msra.mxu0 0.0
      %287 = vmatprep.subr.mxu0 0.0
      %288 = vmatpush2.msra.mxu0 0.0
      %289 = vmatprep.subr.mxu0 0.0
      %290 = vmatpush2.msra.mxu0 0.0
      %291 = vmatprep.subr.mxu0 0.0
      %292 = vmatpush2.msra.mxu0 0.0
      %293 = vmatprep.mubr.f32.mxu0 0.0
      %294 = vmatmul.mubr.f32.gmra.mxu0 %v224
      %v295 = vpop.f32.mrf.mxu0
      %v296 = vadd.f32 0.0, %v295
      %v297 = vpop.f32.mrf.mxu0
      %298 = vdwg.mxu0
      %299 = vrot.lane.b32.xlu0 %v211, 120
      %v300 = vpop.permute.xlu0 %299
      %v301 = vsel %vm222, %v300, 0
      %v303 = vsel %vm226, %v211, 0
      %305 = vmatprep.subr.mxu0 0.0
      %306 = vmatpush1.msra.mxu0 0.0
      %307 = vmatprep.subr.mxu0 0.0
      %308 = vmatpush1.msra.mxu0 0.0
      %309 = vmatprep.subr.mxu0 0.0
      %310 = vmatpush1.msra.mxu0 0.0
      %311 = vmatprep.subr.mxu0 0.0
      %312 = vmatpush1.msra.mxu0 0.0
      %313 = vmatprep.subr.mxu0 0.0
      %314 = vmatpush1.msra.mxu0 0.0
      %315 = vmatprep.subr.mxu0 0.0
      %316 = vmatpush1.msra.mxu0 0.0
      %317 = vmatprep.subr.mxu0 0.0
      %318 = vmatpush1.msra.mxu0 0.0
      %319 = vmatprep.subr.mxu0 0.0
      %320 = vmatpush1.msra.mxu0 0.0
      %321 = vmatprep.subr.mxu0 0.0
      %322 = vmatpush1.msra.mxu0 0.0
      %323 = vmatprep.subr.mxu0 0.0
      %324 = vmatpush1.msra.mxu0 0.0
      %325 = vmatprep.subr.mxu0 0.0
      %326 = vmatpush1.msra.mxu0 0.0
      %327 = vmatprep.subr.mxu0 0.0
      %328 = vmatpush1.msra.mxu0 0.0
      %329 = vmatprep.subr.mxu0 0.0
      %330 = vmatpush1.msra.mxu0 0.0
      %331 = vmatprep.subr.mxu0 0.0
      %332 = vmatpush1.msra.mxu0 0.0
      %333 = vmatprep.subr.mxu0 0.0
      %334 = vmatpush1.msra.mxu0 0.0
      %335 = vmatprep.subr.mxu0 0.0
      %336 = vmatpush1.msra.mxu0 %v303
      %337 = vmatprep.subr.mxu0 0.0
      %338 = vmatpush2.msra.mxu0 0.0
      %339 = vmatprep.subr.mxu0 0.0
      %340 = vmatpush2.msra.mxu0 0.0
      %341 = vmatprep.subr.mxu0 0.0
      %342 = vmatpush2.msra.mxu0 0.0
      %343 = vmatprep.subr.mxu0 0.0
      %344 = vmatpush2.msra.mxu0 0.0
      %345 = vmatprep.subr.mxu0 0.0
      %346 = vmatpush2.msra.mxu0 0.0
      %347 = vmatprep.subr.mxu0 0.0
      %348 = vmatpush2.msra.mxu0 0.0
      %349 = vmatprep.subr.mxu0 0.0
      %350 = vmatpush2.msra.mxu0 0.0
      %351 = vmatprep.subr.mxu0 0.0
      %352 = vmatpush2.msra.mxu0 0.0
      %353 = vmatprep.subr.mxu0 0.0
      %354 = vmatpush2.msra.mxu0 0.0
      %355 = vmatprep.subr.mxu0 0.0
      %356 = vmatpush2.msra.mxu0 0.0
      %357 = vmatprep.subr.mxu0 0.0
      %358 = vmatpush2.msra.mxu0 0.0
      %359 = vmatprep.subr.mxu0 0.0
      %360 = vmatpush2.msra.mxu0 0.0
      %361 = vmatprep.subr.mxu0 0.0
      %362 = vmatpush2.msra.mxu0 0.0
      %363 = vmatprep.subr.mxu0 0.0
      %364 = vmatpush2.msra.mxu0 0.0
      %365 = vmatprep.subr.mxu0 0.0
      %366 = vmatpush2.msra.mxu0 0.0
      %367 = vmatprep.subr.mxu0 0.0
      %368 = vmatpush2.msra.mxu0 0.0
      %369 = vmatprep.mubr.f32.mxu0 0.0
      %370 = vmatmul.mubr.f32.gmra.mxu0 %v301
      %v371 = vpop.f32.mrf.mxu0
      %v372 = vadd.f32 %v296, %v371
      %v373 = vpop.f32.mrf.mxu0
      %374 = vdwg.mxu0
      %v375 = vlaneseq
      %v376 = vshrl.u32 %v375, 7
      %v377 = vsub.s32 4, %v376
      %v378 = vrot.slane %v211, %v377
      %v379 = vadd.f32 %v372, %v378
      %v380 = vmax.f32 %v379, 0.0
      %381 = vrot.lane.b32.xlu0 %v211, 124
      %v382 = vpop.permute.xlu0 %381
      %384 = vrot.lane.b32.xlu0 %v378, 124
      %v385 = vpop.permute.xlu0 %384
      %vm387 = vcmask 31744
      %v389 = vsel %vm387, %v380, 0
      %vm391 = vcmask 1043456
      %v392 = vsel %vm391, %v382, 0
      %394 = vmatprep.subr.mxu0 0.0
      %395 = vmatpush1.msra.mxu0 0.0
      %396 = vmatprep.subr.mxu0 0.0
      %397 = vmatpush1.msra.mxu0 0.0
      %398 = vmatprep.subr.mxu0 0.0
      %399 = vmatpush1.msra.mxu0 0.0
      %400 = vmatprep.subr.mxu0 0.0
      %401 = vmatpush1.msra.mxu0 0.0
      %402 = vmatprep.subr.mxu0 0.0
      %403 = vmatpush1.msra.mxu0 0.0
      %404 = vmatprep.subr.mxu0 0.0
      %405 = vmatpush1.msra.mxu0 0.0
      %406 = vmatprep.subr.mxu0 0.0
      %407 = vmatpush1.msra.mxu0 0.0
      %408 = vmatprep.subr.mxu0 0.0
      %409 = vmatpush1.msra.mxu0 0.0
      %410 = vmatprep.subr.mxu0 0.0
      %411 = vmatpush1.msra.mxu0 0.0
      %412 = vmatprep.subr.mxu0 0.0
      %413 = vmatpush1.msra.mxu0 0.0
      %414 = vmatprep.subr.mxu0 0.0
      %415 = vmatpush1.msra.mxu0 0.0
      %416 = vmatprep.subr.mxu0 0.0
      %417 = vmatpush1.msra.mxu0 0.0
      %418 = vmatprep.subr.mxu0 0.0
      %419 = vmatpush1.msra.mxu0 0.0
      %420 = vmatprep.subr.mxu0 0.0
      %421 = vmatpush1.msra.mxu0 0.0
      %422 = vmatprep.subr.mxu0 0.0
      %423 = vmatpush1.msra.mxu0 0.0
      %424 = vmatprep.subr.mxu0 0.0
      %425 = vmatpush1.msra.mxu0 %v392
      %426 = vmatprep.subr.mxu0 0.0
      %427 = vmatpush2.msra.mxu0 0.0
      %428 = vmatprep.subr.mxu0 0.0
      %429 = vmatpush2.msra.mxu0 0.0
      %430 = vmatprep.subr.mxu0 0.0
      %431 = vmatpush2.msra.mxu0 0.0
      %432 = vmatprep.subr.mxu0 0.0
      %433 = vmatpush2.msra.mxu0 0.0
      %434 = vmatprep.subr.mxu0 0.0
      %435 = vmatpush2.msra.mxu0 0.0
      %436 = vmatprep.subr.mxu0 0.0
      %437 = vmatpush2.msra.mxu0 0.0
      %438 = vmatprep.subr.mxu0 0.0
      %439 = vmatpush2.msra.mxu0 0.0
      %440 = vmatprep.subr.mxu0 0.0
      %441 = vmatpush2.msra.mxu0 0.0
      %442 = vmatprep.subr.mxu0 0.0
      %443 = vmatpush2.msra.mxu0 0.0
      %444 = vmatprep.subr.mxu0 0.0
      %445 = vmatpush2.msra.mxu0 0.0
      %446 = vmatprep.subr.mxu0 0.0
      %447 = vmatpush2.msra.mxu0 0.0
      %448 = vmatprep.subr.mxu0 0.0
      %449 = vmatpush2.msra.mxu0 0.0
      %450 = vmatprep.subr.mxu0 0.0
      %451 = vmatpush2.msra.mxu0 0.0
      %452 = vmatprep.subr.mxu0 0.0
      %453 = vmatpush2.msra.mxu0 0.0
      %454 = vmatprep.subr.mxu0 0.0
      %455 = vmatpush2.msra.mxu0 0.0
      %456 = vmatprep.subr.mxu0 0.0
      %457 = vmatpush2.msra.mxu0 0.0
      %458 = vmatprep.mubr.f32.mxu0 0.0
      %459 = vmatmul.mubr.f32.gmra.mxu0 %v389
      %v460 = vpop.f32.mrf.mxu0
      %v461 = vadd.f32 %v385, %v460
      %v462 = vpop.f32.mrf.mxu0
      %463 = vdwg.mxu0
      %464 = vst.msk [vmem:[#allocation8] sm:$0xf] %vm205, %v461
    $region25: #{tpu_custom_call.1} parent=1 // pred_fallthru
      _
    // Predicated region
    $region26: #{tpu_custom_call.1} parent=1 // pred_check
      _
    $region27: #{tpu_custom_call.1} parent=1 // pred_check_branch
      %466 = sbr.rel (0) target = $region29
    $region28: #{tpu_custom_call.1} parent=1 // pred_region
      %s468 = ssub.s32 64, 64
      %469 = vsyncadd [#allocation5], %s468
      %s471 = sshll.u32 [#allocation8], 4
      %s472 = int_to_ptr.vmem [resolvable:$true] %s471
      %474 = dma.vmem_to_hbm [thread:$0]  %s472, 64, %s2, [#allocation5]
    $region29: #{tpu_custom_call.1} parent=1 // pred_fallthru
      _
    // Predicated region
    $region30: #{tpu_custom_call.1} parent=1 // pred_check
      _
    $region31: #{tpu_custom_call.1} parent=1 // pred_check_branch
      %476 = sbr.rel (0) target = $region33
    $region32: #{tpu_custom_call.1} parent=1 // pred_region
      %477 = dma.done [#allocation5], 64
    $region33: #{tpu_custom_call.1} parent=1 // pred_fallthru
      _
    %478 = vsyncpa [#allocation4], 1
    %479 = vsyncpa [#allocation7], 1
    %480 = vsyncpa [#allocation5], 1

</llo_original>
